<compile_context>
chip_gen: v6e
topology: v6e:2x2x1
jax: 0.10.0
libtpu: 0.0.40
codegen_flags: <defaults>
</compile_context>

<pallas_src>
import jax
import jax.numpy as jnp
from jax.experimental import pallas as pl
from jax.experimental.pallas import tpu as pltpu


def _leaky_relu(x, slope=0.2):
    return jnp.where(x > 0, x, slope * x)


def discriminator_kernel(zt_ref, w1_ref, b1_ref, w2_ref, b2_ref, w3t_ref, b3_ref,
                         out_ref):
    # zt: (in_dim, TB) -- batch on lanes.
    zt = zt_ref[...]

    # Layer 1: Linear(10, hidden1) + LeakyReLU(0.2)   -> (H1, TB)
    h1 = jnp.dot(w1_ref[...], zt, preferred_element_type=jnp.float32) + b1_ref[...]
    h1 = _leaky_relu(h1)

    # Layer 2: Linear(hidden1, hidden2) + LeakyReLU(0.2) -> (H2, TB)
    h2 = jnp.dot(w2_ref[...], h1, preferred_element_type=jnp.float32) + b2_ref[...]
    h2 = _leaky_relu(h2)

    # Layer 3: Linear(hidden2, 1) on the VPU/XLU (broadcast-mul + sublane sum)
    # instead of a (TB,16)x(16,1) MXU matmul.  Result is lane-dense (1, TB).
    logits = jnp.sum(w3t_ref[...] * h2, axis=0, keepdims=True) + b3_ref[...]

    # Sigmoid (exp/logistic runs on the EUP slot).
    out_ref[...] = jax.nn.sigmoid(logits).astype(out_ref.dtype)


def discriminator_forward(z, params, tile_b=512):
    """z: (B, 10) float32.  Returns (B, 1) float32 -- same as the PyTorch module."""
    B, in_dim = z.shape
    w1, b1 = params["w1"], params["b1"]      # (H1, in_dim), (H1, 1)
    w2, b2 = params["w2"], params["b2"]      # (H2, H1),     (H2, 1)
    w3t, b3 = params["w3t"], params["b3"]    # (H2, 1),      (1, 1)

    # Batch tile: multiple of 128 lanes, large enough to amortize per-step
    # overhead but bounded so VMEM stays small for any batch size.
    tb = min(tile_b, pl.cdiv(B, 128) * 128)
    b_pad = pl.cdiv(B, tb) * tb
    num_tiles = b_pad // tb

    # batch-on-lanes: (in_dim, B_pad), zero-padded rows at the tail.
    zt = jnp.pad(z, ((0, b_pad - B), (0, 0))).T

    # Weights/biases are tiny: full-array blocks with constant index_map so they
    # are loaded once and stay resident across grid steps.
    resident = lambda a: pl.BlockSpec(a.shape, lambda i: (0,) * a.ndim)

    out = pl.pallas_call(
        discriminator_kernel,
        out_shape=jax.ShapeDtypeStruct((1, b_pad), jnp.float32),
        grid=(num_tiles,),
        in_specs=[
            pl.BlockSpec((in_dim, tb), lambda i: (0, i)),   # zt tile (pipelined)
            resident(w1), resident(b1),
            resident(w2), resident(b2),
            resident(w3t), resident(b3),
        ],
        out_specs=pl.BlockSpec((1, tb), lambda i: (0, i)),  # lane-dense output
        compiler_params=pltpu.CompilerParams(
            dimension_semantics=("parallel",)),
    )(zt, w1, b1, w2, b2, w3t, b3)

    # Drop batch padding and restore the (B, 1) PyTorch output shape.
    return out[0, :B].reshape(B, 1)


def init_params(key, in_dim=10, hidden1=32, hidden2=16):
    """nn.Linear-style init (uniform +/- 1/sqrt(fan_in)), weights stored in
    PyTorch orientation (out_features, in_features); biases as column vectors."""
    ks = jax.random.split(key, 6)

    def lin(kw, kb, fan_in, fan_out):
        bound = 1.0 / jnp.sqrt(fan_in)
        w = jax.random.uniform(kw, (fan_out, fan_in), jnp.float32, -bound, bound)
        b = jax.random.uniform(kb, (fan_out, 1), jnp.float32, -bound, bound)
        return w, b

    w1, b1 = lin(ks[0], ks[1], in_dim, hidden1)
    w2, b2 = lin(ks[2], ks[3], hidden1, hidden2)
    w3, b3 = lin(ks[4], ks[5], hidden2, 1)
    return {"w1": w1, "b1": b1, "w2": w2, "b2": b2,
            "w3t": w3.T, "b3": b3}       # w3t: (hidden2, 1)


def reference_forward(z, params):
    """Pure-JAX reference in the standard (batch, features) layout."""
    h1 = _leaky_relu(z @ params["w1"].T + params["b1"].T)
    h2 = _leaky_relu(h1 @ params["w2"].T + params["b2"].T)
    logits = h2 @ params["w3t"] + params["b3"]
    return jax.nn.sigmoid(logits)


if __name__ == "__main__":
    key = jax.random.PRNGKey(0)
    k_params, k_z = jax.random.split(key)

    hidden1, hidden2 = 32, 16   # stands in for args.hidden1 / args.hidden2
    batch = 8
    params = init_params(k_params, in_dim=10, hidden1=hidden1, hidden2=hidden2)
    z = jax.random.normal(k_z, (batch, 10), jnp.float32)

    out = discriminator_forward(z, params)
    out = jax.block_until_ready(out)

    ref = reference_forward(z, params)
    assert out.shape == (batch, 1)
    assert jnp.allclose(out, ref, atol=1e-4, rtol=1e-4)

    print("KERNEL_OK")
</pallas_src>

<mosaic_0001>
module attributes {stable_mosaic.version = 11 : i64} {
  func.func @discriminator_kernel(%arg0: i32, %arg1: memref<10x128xf32, #tpu.memory_space<vmem>>, %arg2: memref<32x10xf32, #tpu.memory_space<vmem>>, %arg3: memref<32x1xf32, #tpu.memory_space<vmem>>, %arg4: memref<16x32xf32, #tpu.memory_space<vmem>>, %arg5: memref<16x1xf32, #tpu.memory_space<vmem>>, %arg6: memref<16x1xf32, #tpu.memory_space<vmem>>, %arg7: memref<1x1xf32, #tpu.memory_space<vmem>>, %arg8: memref<1x128xf32, #tpu.memory_space<vmem>>) attributes {dimension_semantics = [#tpu.dimension_semantics<parallel>], iteration_bounds = array<i64: 1>, scalar_prefetch = 0 : i64, scratch_operands = 0 : i64, tpu.core_type = #tpu.core_type<tc>, window_params = [{transform_indices = @transform_0, window_bounds = array<i64: 10, 128>}, {pipeline_mode = #tpu.pipeline_mode<synchronous>, transform_indices = @transform_1, window_bounds = array<i64: 32, 10>}, {pipeline_mode = #tpu.pipeline_mode<synchronous>, transform_indices = @transform_2, window_bounds = array<i64: 32, 1>}, {pipeline_mode = #tpu.pipeline_mode<synchronous>, transform_indices = @transform_3, window_bounds = array<i64: 16, 32>}, {pipeline_mode = #tpu.pipeline_mode<synchronous>, transform_indices = @transform_4, window_bounds = array<i64: 16, 1>}, {pipeline_mode = #tpu.pipeline_mode<synchronous>, transform_indices = @transform_5, window_bounds = array<i64: 16, 1>}, {pipeline_mode = #tpu.pipeline_mode<synchronous>, transform_indices = @transform_6, window_bounds = array<i64: 1, 1>}, {transform_indices = @transform_7, window_bounds = array<i64: 1, 128>}]} {
    %c0 = arith.constant 0 : index
    %c0_0 = arith.constant 0 : index
    %0 = vector.load %arg1[%c0, %c0_0] : memref<10x128xf32, #tpu.memory_space<vmem>>, vector<10x128xf32>
    %c0_1 = arith.constant 0 : index
    %c0_2 = arith.constant 0 : index
    %1 = vector.load %arg2[%c0_1, %c0_2] : memref<32x10xf32, #tpu.memory_space<vmem>>, vector<32x10xf32>
    %cst = arith.constant dense<0.000000e+00> : vector<32x128xf32>
    %2 = tpu.matmul %1, %0, %cst {dimension_numbers = #tpu.dot_dimension_numbers<[1], [0], [0], [1], [0, 0, 1, 1], [], []>} : vector<32x10xf32>, vector<10x128xf32>, vector<32x128xf32> -> vector<32x128xf32>
    %c0_3 = arith.constant 0 : index
    %c0_4 = arith.constant 0 : index
    %3 = vector.load %arg3[%c0_3, %c0_4] : memref<32x1xf32, #tpu.memory_space<vmem>>, vector<32x1xf32>
    %4 = vector.broadcast %3 : vector<32x1xf32> to vector<32x128xf32>
    %5 = arith.addf %2, %4 : vector<32x128xf32>
    %cst_5 = arith.constant 0.000000e+00 : f32
    %6 = vector.broadcast %cst_5 : f32 to vector<32x128xf32>
    %7 = arith.cmpf ogt, %5, %6 : vector<32x128xf32>
    %cst_6 = arith.constant 2.000000e-01 : f32
    %8 = vector.broadcast %cst_6 : f32 to vector<32x128xf32>
    %9 = arith.mulf %8, %5 : vector<32x128xf32>
    %10 = arith.select %7, %5, %9 : vector<32x128xi1>, vector<32x128xf32>
    %c0_7 = arith.constant 0 : index
    %c0_8 = arith.constant 0 : index
    %11 = vector.load %arg4[%c0_7, %c0_8] : memref<16x32xf32, #tpu.memory_space<vmem>>, vector<16x32xf32>
    %cst_9 = arith.constant dense<0.000000e+00> : vector<16x128xf32>
    %12 = tpu.matmul %11, %10, %cst_9 {dimension_numbers = #tpu.dot_dimension_numbers<[1], [0], [0], [1], [0, 0, 1, 1], [], []>} : vector<16x32xf32>, vector<32x128xf32>, vector<16x128xf32> -> vector<16x128xf32>
    %c0_10 = arith.constant 0 : index
    %c0_11 = arith.constant 0 : index
    %13 = vector.load %arg5[%c0_10, %c0_11] : memref<16x1xf32, #tpu.memory_space<vmem>>, vector<16x1xf32>
    %14 = vector.broadcast %13 : vector<16x1xf32> to vector<16x128xf32>
    %15 = arith.addf %12, %14 : vector<16x128xf32>
    %cst_12 = arith.constant 0.000000e+00 : f32
    %16 = vector.broadcast %cst_12 : f32 to vector<16x128xf32>
    %17 = arith.cmpf ogt, %15, %16 : vector<16x128xf32>
    %cst_13 = arith.constant 2.000000e-01 : f32
    %18 = vector.broadcast %cst_13 : f32 to vector<16x128xf32>
    %19 = arith.mulf %18, %15 : vector<16x128xf32>
    %20 = arith.select %17, %15, %19 : vector<16x128xi1>, vector<16x128xf32>
    %c0_14 = arith.constant 0 : index
    %c0_15 = arith.constant 0 : index
    %21 = vector.load %arg6[%c0_14, %c0_15] : memref<16x1xf32, #tpu.memory_space<vmem>>, vector<16x1xf32>
    %22 = vector.broadcast %21 : vector<16x1xf32> to vector<16x128xf32>
    %23 = arith.mulf %22, %20 : vector<16x128xf32>
    %cst_16 = arith.constant dense<0.000000e+00> : vector<128xf32>
    %24 = vector.multi_reduction <add>, %23, %cst_16 [0] : vector<16x128xf32> to vector<128xf32>
    %25 = vector.shape_cast %24 : vector<128xf32> to vector<1x128xf32>
    %c0_17 = arith.constant 0 : index
    %c0_18 = arith.constant 0 : index
    %26 = vector.load %arg7[%c0_17, %c0_18] : memref<1x1xf32, #tpu.memory_space<vmem>>, vector<1x1xf32>
    %27 = vector.broadcast %26 : vector<1x1xf32> to vector<1x128xf32>
    %28 = arith.addf %25, %27 : vector<1x128xf32>
    %29 = arith.negf %28 : vector<1x128xf32>
    %30 = math.exp %29 : vector<1x128xf32>
    %cst_19 = arith.constant 1.000000e+00 : f32
    %31 = vector.broadcast %cst_19 : f32 to vector<1x128xf32>
    %32 = arith.addf %31, %30 : vector<1x128xf32>
    %33 = arith.divf %31, %32 : vector<1x128xf32>
    %c0_20 = arith.constant 0 : index
    %c0_21 = arith.constant 0 : index
    %34 = vector.load %arg8[%c0_20, %c0_21] : memref<1x128xf32, #tpu.memory_space<vmem>>, vector<1x128xf32>
    tpu.vector_store %arg8[%c0_20, %c0_21], %33 {strides = array<i32>} : memref<1x128xf32, #tpu.memory_space<vmem>>, vector<1x128xf32>,
    return
  }
  func.func @transform_0(%arg0: i32) -> (i32, i32) {
    %c0_i32 = arith.constant 0 : i32
    %c0_i32_0 = arith.constant 0 : i32
    return %c0_i32, %arg0 : i32, i32
  }
  func.func @transform_1(%arg0: i32) -> (i32, i32) {
    %c0_i32 = arith.constant 0 : i32
    %c0_i32_0 = arith.constant 0 : i32
    %c0_i32_1 = arith.constant 0 : i32
    return %c0_i32, %c0_i32_0 : i32, i32
  }
  func.func @transform_2(%arg0: i32) -> (i32, i32) {
    %c0_i32 = arith.constant 0 : i32
    %c0_i32_0 = arith.constant 0 : i32
    %c0_i32_1 = arith.constant 0 : i32
    return %c0_i32, %c0_i32_0 : i32, i32
  }
  func.func @transform_3(%arg0: i32) -> (i32, i32) {
    %c0_i32 = arith.constant 0 : i32
    %c0_i32_0 = arith.constant 0 : i32
    %c0_i32_1 = arith.constant 0 : i32
    return %c0_i32, %c0_i32_0 : i32, i32
  }
  func.func @transform_4(%arg0: i32) -> (i32, i32) {
    %c0_i32 = arith.constant 0 : i32
    %c0_i32_0 = arith.constant 0 : i32
    %c0_i32_1 = arith.constant 0 : i32
    return %c0_i32, %c0_i32_0 : i32, i32
  }
  func.func @transform_5(%arg0: i32) -> (i32, i32) {
    %c0_i32 = arith.constant 0 : i32
    %c0_i32_0 = arith.constant 0 : i32
    %c0_i32_1 = arith.constant 0 : i32
    return %c0_i32, %c0_i32_0 : i32, i32
  }
  func.func @transform_6(%arg0: i32) -> (i32, i32) {
    %c0_i32 = arith.constant 0 : i32
    %c0_i32_0 = arith.constant 0 : i32
    %c0_i32_1 = arith.constant 0 : i32
    return %c0_i32, %c0_i32_0 : i32, i32
  }
  func.func @transform_7(%arg0: i32) -> (i32, i32) {
    %c0_i32 = arith.constant 0 : i32
    %c0_i32_0 = arith.constant 0 : i32
    return %c0_i32, %arg0 : i32, i32
  }
}

</mosaic_0001>

<llo_original>
// kernel: tpu_custom_call.1
$region0: #{tpu_custom_call.1}
  #allocation0 [shape = 'u32[]', space=smem, size = 0x4, offset = 0x4, fixed_abs, tag = 'smem constant byte address 0x4 - core index']
  #allocation1 [shape = 'u32[144,128]{1,0:T(1,128)}', space=vmem, size = 0x12000, scoped, tag = 'internal scratch']
  #allocation2 [shape = 'f32[1,1]{1,0:T(1,128)S(1)}', space=vmem, size = 0x200, scoped, tag = 'scoped memory for tpu_custom_call.1']
  %s0 = inlined_call_operand.vmem [shape: f32[10,128], index: 0, kind: input, shape index: {}]
  %s1 = inlined_call_operand.vmem [shape: f32[32,10], index: 1, kind: input, shape index: {}]
  %s2 = inlined_call_operand.vmem [shape: f32[32,1], index: 2, kind: input, shape index: {}]
  %s3 = inlined_call_operand.vmem [shape: f32[16,32], index: 3, kind: input, shape index: {}]
  %s4 = inlined_call_operand.vmem [shape: f32[16,1], index: 4, kind: input, shape index: {}]
  %s5 = inlined_call_operand.vmem [shape: f32[16,1], index: 5, kind: input, shape index: {}]
  %s6 = inlined_call_operand.<no memory space> [shape: f32[1,1], index: 6, kind: input, shape index: {}]
  %s7 = inlined_call_operand.hbm [shape: f32[1,128], index: 7, kind: output, shape index: {}]
  %s8 = sld [smem:[#allocation0]]
  $region38: #{tpu_custom_call.1} parent=0
    _
  %s10 = ssub.s32 1, %s8
  %s11 = scalar_select 0, %s10, %s8
  %v12 = vstv %s6
  %13 = vst [vmem:[#allocation2] sm:$0x1] %v12
  $region1: #{tpu_custom_call.1} parent=0
    #allocation3 [shape = 'u8[512]{0}', space=vmem, size = 0x400, scoped, tag = 'output window, operand 0, single buffered']
    #allocation4 [shape = 's32[1]{0}', space=sflag, size = 0x4, scoped, tag = 'scoped memory for tpu_custom_call.1']
    %14 = vsyncpa [#allocation4], 0
    // Predicated region
    $region2: #{tpu_custom_call.1} parent=1 // pred_check
      _
    $region3: #{tpu_custom_call.1} parent=1 // pred_check_branch
      %16 = sbr.rel (0) target = $region5
    $region4: #{tpu_custom_call.1} parent=1 // pred_region
      _
    $region5: #{tpu_custom_call.1} parent=1 // pred_fallthru
      _
    // Predicated region
    $region6: #{tpu_custom_call.1} parent=1 // pred_check
      _
    $region7: #{tpu_custom_call.1} parent=1 // pred_check_branch
      %18 = sbr.rel (0) target = $region9
    $region8: #{tpu_custom_call.1} parent=1 // pred_region
      _
    $region9: #{tpu_custom_call.1} parent=1 // pred_fallthru
      _
    // Predicated region
    $region10: #{tpu_custom_call.1} parent=1 // pred_check
      _
    $region11: #{tpu_custom_call.1} parent=1 // pred_check_branch
      %20 = sbr.rel (0) target = $region13
    $region12: #{tpu_custom_call.1} parent=1 // pred_region
      _
    $region13: #{tpu_custom_call.1} parent=1 // pred_fallthru
      _
    // Predicated region
    $region14: #{tpu_custom_call.1} parent=1 // pred_check
      _
    $region15: #{tpu_custom_call.1} parent=1 // pred_check_branch
      %22 = sbr.rel (0) target = $region17
    $region16: #{tpu_custom_call.1} parent=1 // pred_region
      _
    $region17: #{tpu_custom_call.1} parent=1 // pred_fallthru
      _
    // Predicated region
    $region18: #{tpu_custom_call.1} parent=1 // pred_check
      _
    $region19: #{tpu_custom_call.1} parent=1 // pred_check_branch
      %24 = sbr.rel (0) target = $region21
    $region20: #{tpu_custom_call.1} parent=1 // pred_region
      _
    $region21: #{tpu_custom_call.1} parent=1 // pred_fallthru
      _
    // Predicated region
    $region22: #{tpu_custom_call.1} parent=1 // pred_check
      _
    $region23: #{tpu_custom_call.1} parent=1 // pred_check_branch
      %26 = sbr.rel (0) target = $region25
    $region24: #{tpu_custom_call.1} parent=1 // pred_region
      _
    $region25: #{tpu_custom_call.1} parent=1 // pred_fallthru
      _
    // Predicated region
    $region26: #{tpu_custom_call.1} parent=1 // pred_check
      _
    $region27: #{tpu_custom_call.1} parent=1 // pred_check_branch
      %28 = sbr.rel (0) target = $region29
    $region28: #{tpu_custom_call.1} parent=1 // pred_region
      _
    $region29: #{tpu_custom_call.1} parent=1 // pred_fallthru
      _
    %v29 = vld [vmem:[%s0] sm:$0xff]
    %v30 = vld [vmem:[%s0 + $0x8] sm:$0x3]
    %v31 = vld [vmem:[%s1] sm:$0xff]
    %v32 = vld [vmem:[%s1 + $0x8] sm:$0xff]
    %v33 = vld [vmem:[%s1 + $0x10] sm:$0xff]
    %v34 = vld [vmem:[%s1 + $0x18] sm:$0xff]
    %v35 = vld [vmem:[%s2] sm:$0xff]
    %v36 = vld [vmem:[%s2 + $0x8] sm:$0xff]
    %v37 = vld [vmem:[%s2 + $0x10] sm:$0xff]
    %v38 = vld [vmem:[%s2 + $0x18] sm:$0xff]
    %40 = vset.pattern.permute.xlu0 0
    %41 = vperm.xlu0 %40, %v35
    %v42 = vpop.permute.xlu0 %41
    %45 = vset.pattern.permute.xlu0 0
    %46 = vperm.xlu0 %45, %v36
    %v47 = vpop.permute.xlu0 %46
    %50 = vset.pattern.permute.xlu0 0
    %51 = vperm.xlu0 %50, %v37
    %v52 = vpop.permute.xlu0 %51
    %55 = vset.pattern.permute.xlu0 0
    %56 = vperm.xlu0 %55, %v38
    %v57 = vpop.permute.xlu0 %56
    %vm59 = vcmask 80896
    %v61 = vsel %vm59, %v31, 0
    %v64 = vsel %vm59, %v32, 0
    %v67 = vsel %vm59, %v33, 0
    %v70 = vsel %vm59, %v34, 0
    %vm72 = vcmask 1041408
    %v74 = vsel %vm72, %v30, 0
    %76 = vmatprep.subr.mxu0 0.0
    %77 = vmatpush1.msra.mxu0 0.0
    %78 = vmatprep.subr.mxu0 0.0
    %79 = vmatpush1.msra.mxu0 0.0
    %80 = vmatprep.subr.mxu0 0.0
    %81 = vmatpush1.msra.mxu0 0.0
    %82 = vmatprep.subr.mxu0 0.0
    %83 = vmatpush1.msra.mxu0 0.0
    %84 = vmatprep.subr.mxu0 0.0
    %85 = vmatpush1.msra.mxu0 0.0
    %86 = vmatprep.subr.mxu0 0.0
    %87 = vmatpush1.msra.mxu0 0.0
    %88 = vmatprep.subr.mxu0 0.0
    %89 = vmatpush1.msra.mxu0 0.0
    %90 = vmatprep.subr.mxu0 0.0
    %91 = vmatpush1.msra.mxu0 0.0
    %92 = vmatprep.subr.mxu0 0.0
    %93 = vmatpush1.msra.mxu0 0.0
    %94 = vmatprep.subr.mxu0 0.0
    %95 = vmatpush1.msra.mxu0 0.0
    %96 = vmatprep.subr.mxu0 0.0
    %97 = vmatpush1.msra.mxu0 0.0
    %98 = vmatprep.subr.mxu0 0.0
    %99 = vmatpush1.msra.mxu0 0.0
    %100 = vmatprep.subr.mxu0 0.0
    %101 = vmatpush1.msra.mxu0 0.0
    %102 = vmatprep.subr.mxu0 0.0
    %103 = vmatpush1.msra.mxu0 0.0
    %104 = vmatprep.subr.mxu0 0.0
    %105 = vmatpush1.msra.mxu0 %v74
    %106 = vmatprep.subr.mxu0 0.0
    %107 = vmatpush1.msra.mxu0 %v29
    %108 = vmatprep.subr.mxu0 0.0
    %109 = vmatpush2.msra.mxu0 0.0
    %110 = vmatprep.subr.mxu0 0.0
    %111 = vmatpush2.msra.mxu0 0.0
    %112 = vmatprep.subr.mxu0 0.0
    %113 = vmatpush2.msra.mxu0 0.0
    %114 = vmatprep.subr.mxu0 0.0
    %115 = vmatpush2.msra.mxu0 0.0
    %116 = vmatprep.subr.mxu0 0.0
    %117 = vmatpush2.msra.mxu0 0.0
    %118 = vmatprep.subr.mxu0 0.0
    %119 = vmatpush2.msra.mxu0 0.0
    %120 = vmatprep.subr.mxu0 0.0
    %121 = vmatpush2.msra.mxu0 0.0
    %122 = vmatprep.subr.mxu0 0.0
    %123 = vmatpush2.msra.mxu0 0.0
    %124 = vmatprep.subr.mxu0 0.0
    %125 = vmatpush2.msra.mxu0 0.0
    %126 = vmatprep.subr.mxu0 0.0
    %127 = vmatpush2.msra.mxu0 0.0
    %128 = vmatprep.subr.mxu0 0.0
    %129 = vmatpush2.msra.mxu0 0.0
    %130 = vmatprep.subr.mxu0 0.0
    %131 = vmatpush2.msra.mxu0 0.0
    %132 = vmatprep.subr.mxu0 0.0
    %133 = vmatpush2.msra.mxu0 0.0
    %134 = vmatprep.subr.mxu0 0.0
    %135 = vmatpush2.msra.mxu0 0.0
    %136 = vmatprep.subr.mxu0 0.0
    %137 = vmatpush2.msra.mxu0 0.0
    %138 = vmatprep.subr.mxu0 0.0
    %139 = vmatpush2.msra.mxu0 0.0
    %140 = vmatprep.mubr.f32.mxu0 0.0
    %141 = vmatmul.mubr.f32.gmra.mxu0 %v61
    %v142 = vpop.f32.mrf.mxu0
    %v143 = vadd.f32 %v42, %v142
    %v144 = vpop.f32.mrf.mxu0
    %145 = vmatprep.mubr.f32.mxu0 0.0
    %146 = vmatmul.mubr.f32.gmra.mxu0 %v64
    %v147 = vpop.f32.mrf.mxu0
    %v148 = vadd.f32 %v47, %v147
    %v149 = vpop.f32.mrf.mxu0
    %150 = vmatprep.mubr.f32.mxu0 0.0
    %151 = vmatmul.mubr.f32.gmra.mxu0 %v67
    %v152 = vpop.f32.mrf.mxu0
    %v153 = vadd.f32 %v52, %v152
    %v154 = vpop.f32.mrf.mxu0
    %155 = vmatprep.mubr.f32.mxu0 0.0
    %156 = vmatmul.mubr.f32.gmra.mxu0 %v70
    %v157 = vpop.f32.mrf.mxu0
    %v158 = vadd.f32 %v57, %v157
    %v159 = vpop.f32.mrf.mxu0
    %160 = vdwg.mxu0
    %vm161 = vcmp.gt.f32.partialorder %v143, 0.0
    %vm162 = vcmp.gt.f32.partialorder %v148, 0.0
    %vm163 = vcmp.gt.f32.partialorder %v153, 0.0
    %vm164 = vcmp.gt.f32.partialorder %v158, 0.0
    %v165 = vmul.f32 %v143, 0.2
    %v166 = vmul.f32 %v148, 0.2
    %v167 = vmul.f32 %v153, 0.2
    %v168 = vmul.f32 %v158, 0.2
    %v169 = vsel %vm161, %v143, %v165
    %v170 = vsel %vm162, %v148, %v166
    %v171 = vsel %vm163, %v153, %v167
    %v172 = vsel %vm164, %v158, %v168
    %v173 = vld [vmem:[%s3] sm:$0xff]
    %v174 = vld [vmem:[%s3 + $0x8] sm:$0xff]
    %v175 = vld [vmem:[%s4] sm:$0xff]
    %v176 = vld [vmem:[%s4 + $0x8] sm:$0xff]
    %178 = vset.pattern.permute.xlu0 0
    %179 = vperm.xlu0 %178, %v175
    %v180 = vpop.permute.xlu0 %179
    %183 = vset.pattern.permute.xlu0 0
    %184 = vperm.xlu0 %183, %v176
    %v185 = vpop.permute.xlu0 %184
    %vm187 = vcmask 261120
    %v189 = vsel %vm187, %v173, 0
    %v192 = vsel %vm187, %v174, 0
    %194 = vmatprep.subr.mxu0 0.0
    %195 = vmatpush1.msra.mxu0 0.0
    %196 = vmatprep.subr.mxu0 0.0
    %197 = vmatpush1.msra.mxu0 0.0
    %198 = vmatprep.subr.mxu0 0.0
    %199 = vmatpush1.msra.mxu0 0.0
    %200 = vmatprep.subr.mxu0 0.0
    %201 = vmatpush1.msra.mxu0 0.0
    %202 = vmatprep.subr.mxu0 0.0
    %203 = vmatpush1.msra.mxu0 0.0
    %204 = vmatprep.subr.mxu0 0.0
    %205 = vmatpush1.msra.mxu0 0.0
    %206 = vmatprep.subr.mxu0 0.0
    %207 = vmatpush1.msra.mxu0 0.0
    %208 = vmatprep.subr.mxu0 0.0
    %209 = vmatpush1.msra.mxu0 0.0
    %210 = vmatprep.subr.mxu0 0.0
    %211 = vmatpush1.msra.mxu0 0.0
    %212 = vmatprep.subr.mxu0 0.0
    %213 = vmatpush1.msra.mxu0 0.0
    %214 = vmatprep.subr.mxu0 0.0
    %215 = vmatpush1.msra.mxu0 0.0
    %216 = vmatprep.subr.mxu0 0.0
    %217 = vmatpush1.msra.mxu0 0.0
    %218 = vmatprep.subr.mxu0 0.0
    %219 = vmatpush1.msra.mxu0 %v172
    %220 = vmatprep.subr.mxu0 0.0
    %221 = vmatpush1.msra.mxu0 %v171
    %222 = vmatprep.subr.mxu0 0.0
    %223 = vmatpush1.msra.mxu0 %v170
    %224 = vmatprep.subr.mxu0 0.0
    %225 = vmatpush1.msra.mxu0 %v169
    %226 = vmatprep.subr.mxu0 0.0
    %227 = vmatpush2.msra.mxu0 0.0
    %228 = vmatprep.subr.mxu0 0.0
    %229 = vmatpush2.msra.mxu0 0.0
    %230 = vmatprep.subr.mxu0 0.0
    %231 = vmatpush2.msra.mxu0 0.0
    %232 = vmatprep.subr.mxu0 0.0
    %233 = vmatpush2.msra.mxu0 0.0
    %234 = vmatprep.subr.mxu0 0.0
    %235 = vmatpush2.msra.mxu0 0.0
    %236 = vmatprep.subr.mxu0 0.0
    %237 = vmatpush2.msra.mxu0 0.0
    %238 = vmatprep.subr.mxu0 0.0
    %239 = vmatpush2.msra.mxu0 0.0
    %240 = vmatprep.subr.mxu0 0.0
    %241 = vmatpush2.msra.mxu0 0.0
    %242 = vmatprep.subr.mxu0 0.0
    %243 = vmatpush2.msra.mxu0 0.0
    %244 = vmatprep.subr.mxu0 0.0
    %245 = vmatpush2.msra.mxu0 0.0
    %246 = vmatprep.subr.mxu0 0.0
    %247 = vmatpush2.msra.mxu0 0.0
    %248 = vmatprep.subr.mxu0 0.0
    %249 = vmatpush2.msra.mxu0 0.0
    %250 = vmatprep.subr.mxu0 0.0
    %251 = vmatpush2.msra.mxu0 0.0
    %252 = vmatprep.subr.mxu0 0.0
    %253 = vmatpush2.msra.mxu0 0.0
    %254 = vmatprep.subr.mxu0 0.0
    %255 = vmatpush2.msra.mxu0 0.0
    %256 = vmatprep.subr.mxu0 0.0
    %257 = vmatpush2.msra.mxu0 0.0
    %258 = vmatprep.mubr.f32.mxu0 0.0
    %259 = vmatmul.mubr.f32.gmra.mxu0 %v189
    %v260 = vpop.f32.mrf.mxu0
    %v261 = vadd.f32 %v180, %v260
    %v262 = vpop.f32.mrf.mxu0
    %263 = vmatprep.mubr.f32.mxu0 0.0
    %264 = vmatmul.mubr.f32.gmra.mxu0 %v192
    %v265 = vpop.f32.mrf.mxu0
    %v266 = vadd.f32 %v185, %v265
    %v267 = vpop.f32.mrf.mxu0
    %268 = vdwg.mxu0
    %vm269 = vcmp.gt.f32.partialorder %v261, 0.0
    %vm270 = vcmp.gt.f32.partialorder %v266, 0.0
    %v271 = vmul.f32 %v261, 0.2
    %v272 = vmul.f32 %v266, 0.2
    %v273 = vsel %vm269, %v261, %v271
    %v274 = vsel %vm270, %v266, %v272
    %v275 = vld [vmem:[%s5] sm:$0xff]
    %v276 = vld [vmem:[%s5 + $0x8] sm:$0xff]
    %278 = vset.pattern.permute.xlu0 0
    %279 = vperm.xlu0 %278, %v275
    %v280 = vpop.permute.xlu0 %279
    %283 = vset.pattern.permute.xlu0 0
    %284 = vperm.xlu0 %283, %v276
    %v285 = vpop.permute.xlu0 %284
    %v287 = vmul.f32 %v280, %v273
    %v288 = vmul.f32 %v285, %v274
    %v289 = vadd.f32 %v287, %v288
    %v290 = vrot.slane %v289, 4
    %v291 = vadd.f32 %v289, %v290
    %v292 = vrot.slane %v291, 2
    %v293 = vadd.f32 %v291, %v292
    %v294 = vrot.slane %v293, 1
    %v295 = vadd.f32 %v293, %v294
    %v296 = vld [vmem:[#allocation2] sm:$0x1]
    %298 = vset.pattern.permute.xlu0 0
    %299 = vperm.xlu0 %298, %v296
    %v300 = vpop.permute.xlu0 %299
    %v302 = vlaneseq
    %v303 = vshrl.u32 %v302, 7
    %v304 = vsub.s32 0, %v303
    %v305 = vrot.slane %v300, %v304
    %v306 = vadd.f32 %v295, %v305
    %v307 = vxor.u32 %v306, 2147483648
    %v308 = vmul.f32 %v307, 1.442695
    %v309 = vpow.pop %v308
    %v310 = vadd.f32 %v309, 1.0
    %v311 = vrcp.pop %v310
    %v312 = vmul.f32 1.0, %v311
    %313 = vst [vmem:[#allocation3] sm:$0x1] %v312
    // Predicated region
    $region30: #{tpu_custom_call.1} parent=1 // pred_check
      _
    $region31: #{tpu_custom_call.1} parent=1 // pred_check_branch
      %315 = sbr.rel (0) target = $region33
    $region32: #{tpu_custom_call.1} parent=1 // pred_region
      %s317 = ssub.s32 16, 16
      %318 = vsyncadd [#allocation4], %s317
      %s320 = sshll.u32 [#allocation3], 4
      %s321 = int_to_ptr.vmem [resolvable:$true] %s320
      %323 = dma.vmem_to_hbm [thread:$0]  %s321, 16, %s7, [#allocation4]
    $region33: #{tpu_custom_call.1} parent=1 // pred_fallthru
      _
    // Predicated region
    $region34: #{tpu_custom_call.1} parent=1 // pred_check
      _
    $region35: #{tpu_custom_call.1} parent=1 // pred_check_branch
      %325 = sbr.rel (0) target = $region37
    $region36: #{tpu_custom_call.1} parent=1 // pred_region
      %326 = dma.done [#allocation4], 16
    $region37: #{tpu_custom_call.1} parent=1 // pred_fallthru
      _
    %327 = vsyncpa [#allocation4], 1

</llo_original>
